<compile_context>
chip_gen: v7x
topology: tpu7x:2x2x1
jax: 0.10.0
libtpu: 0.0.40
codegen_flags: <defaults>
</compile_context>

<pallas_src>
import functools

import jax
import jax.numpy as jnp
from jax.experimental import pallas as pl
from jax.experimental.pallas import tpu as pltpu


# ----------------------------- Fused Pallas kernel -------------------------- #

def fused_forward_kernel(x_ref, slab_ref, o_ref, *, rbf_ls, input_dim, K,
                         hidden_meta, wout_off, hidden_last, bout_off, out_dim):
    """One batch tile of the HierarchicalNet forward; all params in one slab."""
    x = x_ref[...].astype(jnp.float32)                       # (TB, d)
    cT = slab_ref[0:input_dim, 0:K].astype(jnp.float32)      # (d, K), lane-dense

    # --- EmbeddingLayer: phi(x)_k = exp(-||x - c_k||^2 / (2*rbf_ls^2)) ---
    # Exact squared differences on the VPU; no zeros-accumulator materialized.
    sq = [(x[:, dd:dd + 1] - cT[dd:dd + 1, :]) ** 2 for dd in range(input_dim)]
    d2 = sq[0]
    for s in sq[1:]:
        d2 = d2 + s
    h = jnp.exp(d2 * (-0.5 / (rbf_ls * rbf_ls)))              # (TB, K) = X (and X_RBF)
    # TODO(synk): X_RBF would feed prior_per='input' std modulation (unused here).

    # --- Hidden HierarchicalLayers: tanh(h @ W + b), weights slab-resident ---
    for (w_off, b_off, din, dout) in hidden_meta:
        W = slab_ref[w_off:w_off + din, 0:dout]                # (Din, Dout)
        b = slab_ref[b_off:b_off + 1, 0:dout]                  # (1, Dout)
        h = jnp.tanh(jnp.dot(h, W, preferred_element_type=jnp.float32) + b)

    # --- Output HierarchicalLayer (no activation) ---
    w_out = slab_ref[wout_off:wout_off + out_dim, 0:hidden_last]  # (out_dim, H)
    b_out = slab_ref[bout_off:bout_off + 1, 0:out_dim]            # (1, out_dim)
    if out_dim == 1:
        # Lane reduction + lane-dense (1, TB) store instead of a (TB,1) column.
        y = jnp.sum(h * w_out, axis=-1).reshape(1, -1) + b_out     # (1, TB)
        o_ref[...] = y.astype(o_ref.dtype)
    else:
        y = jax.lax.dot_general(
            h, w_out, (((1,), (1,)), ((), ())),
            preferred_element_type=jnp.float32) + b_out
        o_ref[...] = y.astype(o_ref.dtype)


# --------------------------- Parameter slab packing -------------------------- #

def _pack_params_slab(centres, hidden, W_out, b_out):
    """Pack cT, hidden (W,b)*, W_out.T, b_out into one (rows, slab_w) f32 slab.

    Each piece starts on an 8-row boundary (clean sublane-tile alignment).
    Returns (slab, hidden_meta, wout_off, bout_off).
    """
    cT = jnp.asarray(centres, jnp.float32).T                  # (d, K)
    wout_row = jnp.asarray(W_out, jnp.float32).T              # (out_dim, H)
    b_out = jnp.asarray(b_out, jnp.float32)                   # (1, out_dim)

    widths = [cT.shape[1], wout_row.shape[1], b_out.shape[1]]
    widths += [W.shape[1] for (W, _) in hidden]
    slab_w = max(widths)

    pieces, off = [], 0

    def append(piece):
        nonlocal off
        start = off
        p = jnp.pad(piece, ((0, 0), (0, slab_w - piece.shape[1])))
        pad_r = (-p.shape[0]) % 8
        if pad_r:
            p = jnp.pad(p, ((0, pad_r), (0, 0)))
        pieces.append(p)
        off += p.shape[0]
        return start

    append(cT)                                                 # rows [0, 8)
    hidden_meta = []
    for (W, b) in hidden:
        w_off = append(jnp.asarray(W, jnp.float32))
        b_off = append(jnp.asarray(b, jnp.float32))
        hidden_meta.append((w_off, b_off, W.shape[0], W.shape[1]))
    wout_off = append(wout_row)
    bout_off = append(b_out)

    slab = jnp.concatenate(pieces, axis=0)                     # (rows, slab_w)
    return slab, tuple(hidden_meta), wout_off, bout_off


# --------------------------------- Wrapper ----------------------------------- #

def hierarchical_net_forward(X, params, centres, rbf_ls, tile_b=128):
    X = jnp.asarray(X, jnp.float32)
    B, d = X.shape
    hidden = params["hidden"]
    W_out, b_out = params["out"]
    out_dim = W_out.shape[1]
    hidden_last = W_out.shape[0]
    K = centres.shape[0]

    slab, hidden_meta, wout_off, bout_off = _pack_params_slab(
        centres, hidden, W_out, b_out)

    # Batch tiling: TB rows per grid step (multiple of 8; 128 keeps the
    # lane-dense output block a clean multiple of 128 lanes).
    TB = tile_b
    n_tiles = pl.cdiv(B, TB)
    Bp = n_tiles * TB
    if Bp != B:
        X = jnp.pad(X, ((0, Bp - B), (0, 0)))

    kernel = functools.partial(
        fused_forward_kernel,
        rbf_ls=float(rbf_ls),
        input_dim=d,
        K=K,
        hidden_meta=hidden_meta,
        wout_off=wout_off,
        hidden_last=hidden_last,
        bout_off=bout_off,
        out_dim=out_dim,
    )

    in_specs = [
        pl.BlockSpec((TB, d), lambda i: (i, 0)),          # X tile, prefetched per step
        pl.BlockSpec(slab.shape, lambda i: (0, 0)),       # whole slab, fetched once
    ]
    if out_dim == 1:
        out_shape = jax.ShapeDtypeStruct((1, Bp), X.dtype)
        out_spec = pl.BlockSpec((1, TB), lambda i: (0, i))    # lane-dense row
    else:
        out_shape = jax.ShapeDtypeStruct((Bp, out_dim), X.dtype)
        out_spec = pl.BlockSpec((TB, out_dim), lambda i: (i, 0))

    y = pl.pallas_call(
        kernel,
        out_shape=out_shape,
        grid=(n_tiles,),
        in_specs=in_specs,
        out_specs=out_spec,
        compiler_params=pltpu.CompilerParams(
            dimension_semantics=("parallel",)),           # shard tiles across TCs (v7x)
    )(X, slab)

    if out_dim == 1:
        y = y.reshape(Bp, 1)
    return y[:B]


# --------------------------- Parameter sampling ------------------------------ #

def sample_hierarchical_linear(key, din, dout, shape_raw=1.0, rate_raw=1.0):
    """Deterministic sample of (W, b) from the hierarchical Gaussian prior.

    precision ~ Gamma(softplus(shape), softplus(rate)); W ~ N(0, 1/precision).
    Means fixed at zero (fit_means=False).
    """
    k1, k2, k3, k4 = jax.random.split(key, 4)
    shp = jax.nn.softplus(jnp.float32(shape_raw))
    rate = jax.nn.softplus(jnp.float32(rate_raw))
    w_prec = jax.random.gamma(k1, shp) / rate
    b_prec = jax.random.gamma(k2, shp) / rate
    W = jax.random.normal(k3, (din, dout), jnp.float32) / jnp.sqrt(w_prec * din)
    b = jax.random.normal(k4, (1, dout), jnp.float32) / jnp.sqrt(b_prec)
    return W, b


# ----------------------------- Pure-JAX reference ----------------------------- #

def reference_forward(X, params, centres, rbf_ls):
    d2 = jnp.sum((X[:, None, :] - centres[None, :, :]) ** 2, axis=-1)
    h = jnp.exp(-d2 / (2.0 * rbf_ls * rbf_ls))
    for (W, b) in params["hidden"]:
        h = jnp.tanh(h @ W + b)
    W_out, b_out = params["out"]
    return h @ W_out + b_out


# ----------------------------------- Main ------------------------------------ #

if __name__ == "__main__":
    # Module config: input_dim=2, hidden_dims=[64, 64] (first hidden dim must be
    # a perfect square for the 2-D embedding layer), output_dim=1,
    # activation_fn='tanh', rbf_ls=1, domain = unit-square grid.
    batch = 256                     # two 128-row tiles -> exercises the grid
    input_dim, output_dim = 2, 1
    hidden_dims = [64, 64]
    rbf_ls = 1.0

    key = jax.random.PRNGKey(0)
    kx, *layer_keys = jax.random.split(key, 2 + len(hidden_dims))

    # RBF centres: sqrt(hidden_dims[0]) x sqrt(hidden_dims[0]) grid over [0,1]^2
    side = int(hidden_dims[0] ** 0.5)
    g = jnp.linspace(0.0, 1.0, side, dtype=jnp.float32)
    cx, cy = jnp.meshgrid(g, g, indexing="ij")
    centres = jnp.stack([cx.ravel(), cy.ravel()], axis=-1)          # (64, 2)

    # Hierarchical layers: hidden_1 (64 -> 64), output (64 -> 1)
    params = {"hidden": [], "out": None}
    dims = hidden_dims + [output_dim]
    for i in range(1, len(hidden_dims)):
        W, b = sample_hierarchical_linear(layer_keys[i - 1], dims[i - 1], dims[i])
        params["hidden"].append((W, b))
    params["out"] = sample_hierarchical_linear(
        layer_keys[len(hidden_dims) - 1], hidden_dims[-1], output_dim)

    # Input data X: size (batch_size, input_dim)
    X = jax.random.uniform(kx, (batch, input_dim), jnp.float32)

    out = hierarchical_net_forward(X, params, centres, rbf_ls)
    out = jax.block_until_ready(out)

    assert out.shape == (batch, output_dim), out.shape
    assert out.dtype == jnp.float32
    assert bool(jnp.all(jnp.isfinite(out)))

    ref = reference_forward(X, params, centres, rbf_ls)
    assert bool(jnp.allclose(out, ref, atol=1e-4, rtol=1e-4)), (
        float(jnp.max(jnp.abs(out - ref))))

    print("KERNEL_OK")
</pallas_src>

<mosaic_0001>
module attributes {stable_mosaic.version = 11 : i64} {
  func.func @fused_forward_kernel(%arg0: i32, %arg1: memref<128x2xf32, #tpu.memory_space<vmem>>, %arg2: memref<96x64xf32, #tpu.memory_space<vmem>>, %arg3: memref<1x128xf32, #tpu.memory_space<vmem>>) attributes {dimension_semantics = [#tpu.dimension_semantics<parallel>], iteration_bounds = array<i64: 2>, scalar_prefetch = 0 : i64, scratch_operands = 0 : i64, tpu.core_type = #tpu.core_type<tc>, window_params = [{transform_indices = @transform_0, window_bounds = array<i64: 128, 2>}, {pipeline_mode = #tpu.pipeline_mode<synchronous>, transform_indices = @transform_1, window_bounds = array<i64: 96, 64>}, {transform_indices = @transform_2, window_bounds = array<i64: 1, 128>}]} {
    %c0 = arith.constant 0 : index
    %c0_0 = arith.constant 0 : index
    %0 = vector.load %arg1[%c0, %c0_0] : memref<128x2xf32, #tpu.memory_space<vmem>>, vector<128x2xf32>
    %c0_1 = arith.constant 0 : index
    %c0_2 = arith.constant 0 : index
    %1 = vector.load %arg2[%c0_1, %c0_2] : memref<96x64xf32, #tpu.memory_space<vmem>>, vector<2x64xf32>
    %2 = vector.extract_strided_slice %0 {offsets = [0, 0], sizes = [128, 1], strides = [1, 1]} : vector<128x2xf32> to vector<128x1xf32>
    %3 = vector.extract_strided_slice %1 {offsets = [0, 0], sizes = [1, 64], strides = [1, 1]} : vector<2x64xf32> to vector<1x64xf32>
    %4 = vector.broadcast %2 : vector<128x1xf32> to vector<128x64xf32>
    %5 = vector.broadcast %3 : vector<1x64xf32> to vector<128x64xf32>
    %6 = arith.subf %4, %5 : vector<128x64xf32>
    %7 = arith.mulf %6, %6 : vector<128x64xf32>
    %8 = vector.extract_strided_slice %0 {offsets = [0, 1], sizes = [128, 1], strides = [1, 1]} : vector<128x2xf32> to vector<128x1xf32>
    %9 = vector.extract_strided_slice %1 {offsets = [1, 0], sizes = [1, 64], strides = [1, 1]} : vector<2x64xf32> to vector<1x64xf32>
    %10 = vector.broadcast %8 : vector<128x1xf32> to vector<128x64xf32>
    %11 = vector.broadcast %9 : vector<1x64xf32> to vector<128x64xf32>
    %12 = arith.subf %10, %11 : vector<128x64xf32>
    %13 = arith.mulf %12, %12 : vector<128x64xf32>
    %14 = arith.addf %7, %13 : vector<128x64xf32>
    %cst = arith.constant -5.000000e-01 : f32
    %15 = vector.broadcast %cst : f32 to vector<128x64xf32>
    %16 = arith.mulf %14, %15 : vector<128x64xf32>
    %17 = math.exp %16 : vector<128x64xf32>
    %c8 = arith.constant 8 : index
    %c0_3 = arith.constant 0 : index
    %18 = vector.load %arg2[%c8, %c0_3] : memref<96x64xf32, #tpu.memory_space<vmem>>, vector<64x64xf32>
    %c72 = arith.constant 72 : index
    %c0_4 = arith.constant 0 : index
    %19 = vector.load %arg2[%c72, %c0_4] : memref<96x64xf32, #tpu.memory_space<vmem>>, vector<1x64xf32>
    %cst_5 = arith.constant dense<0.000000e+00> : vector<128x64xf32>
    %20 = tpu.matmul %17, %18, %cst_5 {dimension_numbers = #tpu.dot_dimension_numbers<[1], [0], [0], [1], [0, 0, 1, 1], [], []>} : vector<128x64xf32>, vector<64x64xf32>, vector<128x64xf32> -> vector<128x64xf32>
    %21 = vector.broadcast %19 : vector<1x64xf32> to vector<128x64xf32>
    %22 = arith.addf %20, %21 : vector<128x64xf32>
    %23 = math.tanh %22 : vector<128x64xf32>
    %c80 = arith.constant 80 : index
    %c0_6 = arith.constant 0 : index
    %24 = vector.load %arg2[%c80, %c0_6] : memref<96x64xf32, #tpu.memory_space<vmem>>, vector<1x64xf32>
    %c88 = arith.constant 88 : index
    %c0_7 = arith.constant 0 : index
    %25 = vector.load %arg2[%c88, %c0_7] : memref<96x64xf32, #tpu.memory_space<vmem>>, vector<1x1xf32>
    %26 = vector.broadcast %24 : vector<1x64xf32> to vector<128x64xf32>
    %27 = arith.mulf %23, %26 : vector<128x64xf32>
    %cst_8 = arith.constant dense<0.000000e+00> : vector<128xf32>
    %28 = vector.multi_reduction <add>, %27, %cst_8 [1] : vector<128x64xf32> to vector<128xf32>
    %29 = vector.shape_cast %28 : vector<128xf32> to vector<1x128xf32>
    %30 = vector.broadcast %25 : vector<1x1xf32> to vector<1x128xf32>
    %31 = arith.addf %29, %30 : vector<1x128xf32>
    %c0_9 = arith.constant 0 : index
    %c0_10 = arith.constant 0 : index
    %32 = vector.load %arg3[%c0_9, %c0_10] : memref<1x128xf32, #tpu.memory_space<vmem>>, vector<1x128xf32>
    tpu.vector_store %arg3[%c0_9, %c0_10], %31 {strides = array<i32>} : memref<1x128xf32, #tpu.memory_space<vmem>>, vector<1x128xf32>,
    return
  }
  func.func @transform_0(%arg0: i32) -> (i32, i32) {
    %c0_i32 = arith.constant 0 : i32
    %c0_i32_0 = arith.constant 0 : i32
    return %arg0, %c0_i32 : i32, i32
  }
  func.func @transform_1(%arg0: i32) -> (i32, i32) {
    %c0_i32 = arith.constant 0 : i32
    %c0_i32_0 = arith.constant 0 : i32
    %c0_i32_1 = arith.constant 0 : i32
    return %c0_i32, %c0_i32_0 : i32, i32
  }
  func.func @transform_2(%arg0: i32) -> (i32, i32) {
    %c0_i32 = arith.constant 0 : i32
    %c0_i32_0 = arith.constant 0 : i32
    return %c0_i32, %arg0 : i32, i32
  }
}

</mosaic_0001>

<llo_original>
// kernel: tpu_custom_call.1
$region0: #{tpu_custom_call.1}
  #allocation0 [shape = 'u32[]', space=smem, size = 0x4, offset = 0x4, fixed_abs, tag = 'smem constant byte address 0x4 - core index']
  #allocation1 [shape = 'u32[144,128]{1,0:T(1,128)}', space=vmem, size = 0x12000, scoped, tag = 'internal scratch']
  %s0 = inlined_call_operand.vmem [shape: f32[256,2], index: 0, kind: input, shape index: {}]
  %s1 = inlined_call_operand.vmem [shape: f32[96,64], index: 1, kind: input, shape index: {}]
  %s2 = inlined_call_operand.hbm [shape: f32[1,256], index: 2, kind: output, shape index: {}]
  %s3 = sld [smem:[#allocation0]]
  $region41: #{tpu_custom_call.1} parent=0
    _
  %s5 = ssub.s32 1, %s3
  %s6 = scalar_select 0, %s5, %s3
  $region1: #{tpu_custom_call.1} parent=0
    #allocation2 [shape = 'u8[1024]{0}', space=vmem, size = 0x400, scoped, tag = 'output window, operand 0']
    #allocation3 [shape = 's32[2]{0}', space=sflag, size = 0x8, scoped, tag = 'scoped memory for tpu_custom_call.1']
    %7 = vsyncpa [#allocation3], 0
    %s8 = scalar_lea.sflag [#allocation3], 1
    %9 = vsyncpa %s8, 0
    loop: start=0, step=1, limit=4
    $region2: #{tpu_custom_call.1} parent=1 // loop_pre_header
      _
    $region3: #{tpu_custom_call.1} parent=1 // loop_header
      %s11 = sphi 0, %s15
      %p12 = scmp.ge.s32.totalorder %s11, 4
      %s21 = sphi 0, %s23
      %s24 = sphi 0, %s21
      %s25 = sphi 0, %s24
      %s41 = sphi 0, %s25
      %s45 = sphi 0, %s45
      %s47 = sphi 0, %s45
      %s48 = sphi 0, %s47
      %s62 = sphi 0, %s48
      %s68 = sphi 0, %s70
      %s71 = sphi 0, %s68
      %s72 = sphi 0, %s71
      %s88 = sphi 0, %s72
    $region4: #{tpu_custom_call.1} parent=1 // loop_header_branch
      %14 = sbr.rel (%p12) target = $region8
    $region5: #{tpu_custom_call.1} parent=1 // loop_body
      %s16 = ssub.s32 %s11, 1
      %s17 = ssub.s32 %s11, 2
      %s18 = sadd.s32 %s11, 1
      %s19 = ssub.s32 %s11, %s18
      %p20 = scmp.eq.s32.totalorder %s19, 0
      %s22 = sadd.s32 %s21, 1
      %s23 = scalar_select %p20, %s21, %s22
      %p26 = pneg %p20
      %p27 = scmp.eq.s32.totalorder %s11, 1
      %p28 = por %p26, %p27
      %p29 = scmp.ne.s32.totalorder %s21, %s24
      %p30 = scmp.eq.s32.totalorder %s11, 0
      %p31 = por %p29, %p30
      %p32 = scmp.ne.s32.totalorder %s21, %s24
      %p33 = scmp.eq.s32.totalorder %s16, 1
      %p34 = por %p32, %p33
      %p35 = scmp.ne.s32.totalorder %s24, %s25
      %p36 = scmp.eq.s32.totalorder %s16, 0
      %p37 = por %p35, %p36
      %p38 = scmp.ne.s32.totalorder %s24, %s25
      %p39 = scmp.eq.s32.totalorder %s17, 1
      %p40 = por %p38, %p39
      %p42 = scmp.ne.s32.totalorder %s25, %s41
      %p43 = scmp.eq.s32.totalorder %s17, 0
      %p44 = por %p42, %p43
      %s46 = sadd.s32 %s45, 1
      %p49 = scmp.eq.s32.totalorder %s11, 1
      %p50 = scmp.ne.s32.totalorder %s45, %s47
      %p51 = scmp.eq.s32.totalorder %s11, 0
      %p52 = por %p50, %p51
      %p53 = scmp.ne.s32.totalorder %s45, %s47
      %p54 = scmp.eq.s32.totalorder %s16, 1
      %p55 = por %p53, %p54
      %p56 = scmp.ne.s32.totalorder %s47, %s48
      %p57 = scmp.eq.s32.totalorder %s16, 0
      %p58 = por %p56, %p57
      %p59 = scmp.ne.s32.totalorder %s47, %s48
      %p60 = scmp.eq.s32.totalorder %s17, 1
      %p61 = por %p59, %p60
      %p63 = scmp.ne.s32.totalorder %s48, %s62
      %p64 = scmp.eq.s32.totalorder %s17, 0
      %p65 = por %p63, %p64
      %s66 = ssub.s32 %s11, %s18
      %p67 = scmp.eq.s32.totalorder %s66, 0
      %s69 = sadd.s32 %s68, 1
      %s70 = scalar_select %p67, %s68, %s69
      %p73 = pneg %p67
      %p74 = scmp.eq.s32.totalorder %s11, 1
      %p75 = por %p73, %p74
      %p76 = scmp.ne.s32.totalorder %s68, %s71
      %p77 = scmp.eq.s32.totalorder %s11, 0
      %p78 = por %p76, %p77
      %p79 = scmp.ne.s32.totalorder %s68, %s71
      %p80 = scmp.eq.s32.totalorder %s16, 1
      %p81 = por %p79, %p80
      %p82 = scmp.ne.s32.totalorder %s71, %s72
      %p83 = scmp.eq.s32.totalorder %s16, 0
      %p84 = por %p82, %p83
      %p85 = scmp.ne.s32.totalorder %s71, %s72
      %p86 = scmp.eq.s32.totalorder %s17, 1
      %p87 = por %p85, %p86
      %p89 = scmp.ne.s32.totalorder %s72, %s88
      %p90 = scmp.eq.s32.totalorder %s17, 0
      %p91 = por %p89, %p90
      %p92 = scmp.le.s32.totalorder 1, %s11
      %p93 = scmp.lt.s32.totalorder %s11, 3
      %p94 = pnand %p92, %p93
      %p95 = pneg %p94
      // Predicated region
      $region9: #{tpu_custom_call.1} parent=5 // pred_check
        _
      $region10: #{tpu_custom_call.1} parent=5 // pred_check_branch
        %97 = sbr.rel (%p94) target = $region12
      $region11: #{tpu_custom_call.1} parent=5 // pred_region
        %s98 = ssub.s32 %s11, 1
        // Predicated region
        $region13: #{tpu_custom_call.1} parent=11 // pred_check
          %p99 = pneg %p58
        $region14: #{tpu_custom_call.1} parent=11 // pred_check_branch
          %101 = sbr.rel (%p99) target = $region16
        $region15: #{tpu_custom_call.1} parent=11 // pred_region
          _
        $region16: #{tpu_custom_call.1} parent=11 // pred_fallthru
          _
      $region12: #{tpu_custom_call.1} parent=5 // pred_fallthru
        _
      %p102 = scmp.lt.s32.totalorder %s11, 2
      // Predicated region
      $region17: #{tpu_custom_call.1} parent=5 // pred_check
        %p103 = pneg %p102
      $region18: #{tpu_custom_call.1} parent=5 // pred_check_branch
        %105 = sbr.rel (%p103) target = $region20
      $region19: #{tpu_custom_call.1} parent=5 // pred_region
        // Predicated region
        $region21: #{tpu_custom_call.1} parent=19 // pred_check
          %p106 = pneg %p31
        $region22: #{tpu_custom_call.1} parent=19 // pred_check_branch
          %108 = sbr.rel (%p106) target = $region24
        $region23: #{tpu_custom_call.1} parent=19 // pred_region
          %s109 = smul.u32 16, %s11
          %p110 = scmp.lt.s32.totalorder %s109, 31
          %s111 = scalar_select %p110, %s109, 31
          %s112 = smul.addr %s111, 8
          %s113 = scalar_lea.vmem %s0, %s112
          %s114 = smul.u32 16, %s11
        $region24: #{tpu_custom_call.1} parent=19 // pred_fallthru
          _
      $region20: #{tpu_custom_call.1} parent=5 // pred_fallthru
        _
      %p115 = scmp.le.s32.totalorder 1, %s11
      %p116 = scmp.lt.s32.totalorder %s11, 3
      %p117 = pnand %p115, %p116
      %p118 = pneg %p117
      // Predicated region
      $region25: #{tpu_custom_call.1} parent=5 // pred_check
        _
      $region26: #{tpu_custom_call.1} parent=5 // pred_check_branch
        %120 = sbr.rel (%p117) target = $region28
      $region27: #{tpu_custom_call.1} parent=5 // pred_region
        %s121 = ssub.s32 %s11, 1
        %s122 = smul.u32 16, %s16
        %p123 = scmp.lt.s32.totalorder %s122, 31
        %s124 = scalar_select %p123, %s122, 31
        %s125 = smul.addr %s124, 8
        %s126 = scalar_lea.vmem %s0, %s125
        %p127 = pneg %p37
        %p128 = pneg %p34
        %p129 = pneg %p58
        %p130 = pneg %p55
        %p131 = pneg %p84
        %p132 = pneg %p81
        %s133 = sand.u32 %s71, 1
        %s134 = scalar_lea.sflag [#allocation3], %s133
        %s135 = sand.u32 %s71, 1
        %s136 = scalar_lea.vmem [#allocation2], %s135
        %s137 = smul.u32 16, %s16
        %p138 = scmp.lt.s32.totalorder %s137, 31
        %s139 = scalar_select %p138, %s137, 31
        %s140 = smul.addr %s139, 8
        %s141 = scalar_lea.vmem %s0, %s140
        %s142 = smul.u32 16, %s16
        %v143 = vld [vmem:[%s141] sm:$0xff]
        %v144 = vld [vmem:[%s141 + $0x8] sm:$0xff]
        %v145 = vld [vmem:[%s141 + $0x10] sm:$0xff]
        %v146 = vld [vmem:[%s141 + $0x18] sm:$0xff]
        %v147 = vld [vmem:[%s141 + $0x20] sm:$0xff]
        %v148 = vld [vmem:[%s141 + $0x28] sm:$0xff]
        %v149 = vld [vmem:[%s141 + $0x30] sm:$0xff]
        %v150 = vld [vmem:[%s141 + $0x38] sm:$0xff]
        %v151 = vld [vmem:[%s141 + $0x40] sm:$0xff]
        %v152 = vld [vmem:[%s141 + $0x48] sm:$0xff]
        %v153 = vld [vmem:[%s141 + $0x50] sm:$0xff]
        %v154 = vld [vmem:[%s141 + $0x58] sm:$0xff]
        %v155 = vld [vmem:[%s141 + $0x60] sm:$0xff]
        %v156 = vld [vmem:[%s141 + $0x68] sm:$0xff]
        %v157 = vld [vmem:[%s141 + $0x70] sm:$0xff]
        %v158 = vld [vmem:[%s141 + $0x78] sm:$0xff]
        %v159 = vld [vmem:[%s1] sm:$0x3]
        %161 = vset.pattern.permute.xlu0 0
        %162 = vperm.xlu0 %161, %v143
        %v163 = vpop.permute.xlu0 %162
        %166 = vset.pattern.permute.xlu0 0
        %167 = vperm.xlu0 %166, %v144
        %v168 = vpop.permute.xlu0 %167
        %171 = vset.pattern.permute.xlu0 0
        %172 = vperm.xlu0 %171, %v145
        %v173 = vpop.permute.xlu0 %172
        %176 = vset.pattern.permute.xlu0 0
        %177 = vperm.xlu0 %176, %v146
        %v178 = vpop.permute.xlu0 %177
        %181 = vset.pattern.permute.xlu0 0
        %182 = vperm.xlu0 %181, %v147
        %v183 = vpop.permute.xlu0 %182
        %186 = vset.pattern.permute.xlu0 0
        %187 = vperm.xlu0 %186, %v148
        %v188 = vpop.permute.xlu0 %187
        %191 = vset.pattern.permute.xlu0 0
        %192 = vperm.xlu0 %191, %v149
        %v193 = vpop.permute.xlu0 %192
        %196 = vset.pattern.permute.xlu0 0
        %197 = vperm.xlu0 %196, %v150
        %v198 = vpop.permute.xlu0 %197
        %201 = vset.pattern.permute.xlu0 0
        %202 = vperm.xlu0 %201, %v151
        %v203 = vpop.permute.xlu0 %202
        %206 = vset.pattern.permute.xlu0 0
        %207 = vperm.xlu0 %206, %v152
        %v208 = vpop.permute.xlu0 %207
        %211 = vset.pattern.permute.xlu0 0
        %212 = vperm.xlu0 %211, %v153
        %v213 = vpop.permute.xlu0 %212
        %216 = vset.pattern.permute.xlu0 0
        %217 = vperm.xlu0 %216, %v154
        %v218 = vpop.permute.xlu0 %217
        %221 = vset.pattern.permute.xlu0 0
        %222 = vperm.xlu0 %221, %v155
        %v223 = vpop.permute.xlu0 %222
        %226 = vset.pattern.permute.xlu0 0
        %227 = vperm.xlu0 %226, %v156
        %v228 = vpop.permute.xlu0 %227
        %231 = vset.pattern.permute.xlu0 0
        %232 = vperm.xlu0 %231, %v157
        %v233 = vpop.permute.xlu0 %232
        %236 = vset.pattern.permute.xlu0 0
        %237 = vperm.xlu0 %236, %v158
        %v238 = vpop.permute.xlu0 %237
        %v240 = vlaneseq
        %v241 = vshrl.u32 %v240, 7
        %v242 = vsub.s32 0, %v241
        %v243 = vrot.slane %v159, %v242
        %v244 = vsub.f32 %v163, %v243
        %v245 = vsub.f32 %v168, %v243
        %v246 = vsub.f32 %v173, %v243
        %v247 = vsub.f32 %v178, %v243
        %v248 = vsub.f32 %v183, %v243
        %v249 = vsub.f32 %v188, %v243
        %v250 = vsub.f32 %v193, %v243
        %v251 = vsub.f32 %v198, %v243
        %v252 = vsub.f32 %v203, %v243
        %v253 = vsub.f32 %v208, %v243
        %v254 = vsub.f32 %v213, %v243
        %v255 = vsub.f32 %v218, %v243
        %v256 = vsub.f32 %v223, %v243
        %v257 = vsub.f32 %v228, %v243
        %v258 = vsub.f32 %v233, %v243
        %v259 = vsub.f32 %v238, %v243
        %v260 = vmul.f32 %v244, %v244
        %v261 = vmul.f32 %v245, %v245
        %v262 = vmul.f32 %v246, %v246
        %v263 = vmul.f32 %v247, %v247
        %v264 = vmul.f32 %v248, %v248
        %v265 = vmul.f32 %v249, %v249
        %v266 = vmul.f32 %v250, %v250
        %v267 = vmul.f32 %v251, %v251
        %v268 = vmul.f32 %v252, %v252
        %v269 = vmul.f32 %v253, %v253
        %v270 = vmul.f32 %v254, %v254
        %v271 = vmul.f32 %v255, %v255
        %v272 = vmul.f32 %v256, %v256
        %v273 = vmul.f32 %v257, %v257
        %v274 = vmul.f32 %v258, %v258
        %v275 = vmul.f32 %v259, %v259
        %276 = vset.pattern.permute.xlu0 1
        %277 = vperm.xlu0 %276, %v143
        %v278 = vpop.permute.xlu0 %277
        %280 = vset.pattern.permute.xlu0 1
        %281 = vperm.xlu0 %280, %v144
        %v282 = vpop.permute.xlu0 %281
        %284 = vset.pattern.permute.xlu0 1
        %285 = vperm.xlu0 %284, %v145
        %v286 = vpop.permute.xlu0 %285
        %288 = vset.pattern.permute.xlu0 1
        %289 = vperm.xlu0 %288, %v146
        %v290 = vpop.permute.xlu0 %289
        %292 = vset.pattern.permute.xlu0 1
        %293 = vperm.xlu0 %292, %v147
        %v294 = vpop.permute.xlu0 %293
        %296 = vset.pattern.permute.xlu0 1
        %297 = vperm.xlu0 %296, %v148
        %v298 = vpop.permute.xlu0 %297
        %300 = vset.pattern.permute.xlu0 1
        %301 = vperm.xlu0 %300, %v149
        %v302 = vpop.permute.xlu0 %301
        %304 = vset.pattern.permute.xlu0 1
        %305 = vperm.xlu0 %304, %v150
        %v306 = vpop.permute.xlu0 %305
        %308 = vset.pattern.permute.xlu0 1
        %309 = vperm.xlu0 %308, %v151
        %v310 = vpop.permute.xlu0 %309
        %312 = vset.pattern.permute.xlu0 1
        %313 = vperm.xlu0 %312, %v152
        %v314 = vpop.permute.xlu0 %313
        %316 = vset.pattern.permute.xlu0 1
        %317 = vperm.xlu0 %316, %v153
        %v318 = vpop.permute.xlu0 %317
        %320 = vset.pattern.permute.xlu0 1
        %321 = vperm.xlu0 %320, %v154
        %v322 = vpop.permute.xlu0 %321
        %324 = vset.pattern.permute.xlu0 1
        %325 = vperm.xlu0 %324, %v155
        %v326 = vpop.permute.xlu0 %325
        %328 = vset.pattern.permute.xlu0 1
        %329 = vperm.xlu0 %328, %v156
        %v330 = vpop.permute.xlu0 %329
        %332 = vset.pattern.permute.xlu0 1
        %333 = vperm.xlu0 %332, %v157
        %v334 = vpop.permute.xlu0 %333
        %336 = vset.pattern.permute.xlu0 1
        %337 = vperm.xlu0 %336, %v158
        %v338 = vpop.permute.xlu0 %337
        %v340 = vlaneseq
        %v341 = vshrl.u32 %v340, 7
        %v342 = vsub.s32 1, %v341
        %v343 = vrot.slane %v159, %v342
        %v344 = vsub.f32 %v278, %v343
        %v345 = vsub.f32 %v282, %v343
        %v346 = vsub.f32 %v286, %v343
        %v347 = vsub.f32 %v290, %v343
        %v348 = vsub.f32 %v294, %v343
        %v349 = vsub.f32 %v298, %v343
        %v350 = vsub.f32 %v302, %v343
        %v351 = vsub.f32 %v306, %v343
        %v352 = vsub.f32 %v310, %v343
        %v353 = vsub.f32 %v314, %v343
        %v354 = vsub.f32 %v318, %v343
        %v355 = vsub.f32 %v322, %v343
        %v356 = vsub.f32 %v326, %v343
        %v357 = vsub.f32 %v330, %v343
        %v358 = vsub.f32 %v334, %v343
        %v359 = vsub.f32 %v338, %v343
        %v360 = vmul.f32 %v344, %v344
        %v361 = vmul.f32 %v345, %v345
        %v362 = vmul.f32 %v346, %v346
        %v363 = vmul.f32 %v347, %v347
        %v364 = vmul.f32 %v348, %v348
        %v365 = vmul.f32 %v349, %v349
        %v366 = vmul.f32 %v350, %v350
        %v367 = vmul.f32 %v351, %v351
        %v368 = vmul.f32 %v352, %v352
        %v369 = vmul.f32 %v353, %v353
        %v370 = vmul.f32 %v354, %v354
        %v371 = vmul.f32 %v355, %v355
        %v372 = vmul.f32 %v356, %v356
        %v373 = vmul.f32 %v357, %v357
        %v374 = vmul.f32 %v358, %v358
        %v375 = vmul.f32 %v359, %v359
        %v376 = vadd.f32 %v260, %v360
        %v377 = vadd.f32 %v261, %v361
        %v378 = vadd.f32 %v262, %v362
        %v379 = vadd.f32 %v263, %v363
        %v380 = vadd.f32 %v264, %v364
        %v381 = vadd.f32 %v265, %v365
        %v382 = vadd.f32 %v266, %v366
        %v383 = vadd.f32 %v267, %v367
        %v384 = vadd.f32 %v268, %v368
        %v385 = vadd.f32 %v269, %v369
        %v386 = vadd.f32 %v270, %v370
        %v387 = vadd.f32 %v271, %v371
        %v388 = vadd.f32 %v272, %v372
        %v389 = vadd.f32 %v273, %v373
        %v390 = vadd.f32 %v274, %v374
        %v391 = vadd.f32 %v275, %v375
        %v392 = vmul.f32 %v376, -0.5
        %v393 = vmul.f32 %v377, -0.5
        %v394 = vmul.f32 %v378, -0.5
        %v395 = vmul.f32 %v379, -0.5
        %v396 = vmul.f32 %v380, -0.5
        %v397 = vmul.f32 %v381, -0.5
        %v398 = vmul.f32 %v382, -0.5
        %v399 = vmul.f32 %v383, -0.5
        %v400 = vmul.f32 %v384, -0.5
        %v401 = vmul.f32 %v385, -0.5
        %v402 = vmul.f32 %v386, -0.5
        %v403 = vmul.f32 %v387, -0.5
        %v404 = vmul.f32 %v388, -0.5
        %v405 = vmul.f32 %v389, -0.5
        %v406 = vmul.f32 %v390, -0.5
        %v407 = vmul.f32 %v391, -0.5
        %v408 = vmul.f32 %v392, 1.442695
        %v409 = vpow.pop %v408
        %v410 = vmul.f32 %v393, 1.442695
        %v411 = vpow.pop %v410
        %v412 = vmul.f32 %v394, 1.442695
        %v413 = vpow.pop %v412
        %v414 = vmul.f32 %v395, 1.442695
        %v415 = vpow.pop %v414
        %v416 = vmul.f32 %v396, 1.442695
        %v417 = vpow.pop %v416
        %v418 = vmul.f32 %v397, 1.442695
        %v419 = vpow.pop %v418
        %v420 = vmul.f32 %v398, 1.442695
        %v421 = vpow.pop %v420
        %v422 = vmul.f32 %v399, 1.442695
        %v423 = vpow.pop %v422
        %v424 = vmul.f32 %v400, 1.442695
        %v425 = vpow.pop %v424
        %v426 = vmul.f32 %v401, 1.442695
        %v427 = vpow.pop %v426
        %v428 = vmul.f32 %v402, 1.442695
        %v429 = vpow.pop %v428
        %v430 = vmul.f32 %v403, 1.442695
        %v431 = vpow.pop %v430
        %v432 = vmul.f32 %v404, 1.442695
        %v433 = vpow.pop %v432
        %v434 = vmul.f32 %v405, 1.442695
        %v435 = vpow.pop %v434
        %v436 = vmul.f32 %v406, 1.442695
        %v437 = vpow.pop %v436
        %v438 = vmul.f32 %v407, 1.442695
        %v439 = vpow.pop %v438
        %v440 = vld [vmem:[%s1 + $0x8] sm:$0xff]
        %v441 = vld [vmem:[%s1 + $0x10] sm:$0xff]
        %v442 = vld [vmem:[%s1 + $0x18] sm:$0xff]
        %v443 = vld [vmem:[%s1 + $0x20] sm:$0xff]
        %v444 = vld [vmem:[%s1 + $0x28] sm:$0xff]
        %v445 = vld [vmem:[%s1 + $0x30] sm:$0xff]
        %v446 = vld [vmem:[%s1 + $0x38] sm:$0xff]
        %v447 = vld [vmem:[%s1 + $0x40] sm:$0xff]
        %v448 = vld [vmem:[%s1 + $0x48] sm:$0x1]
        %v449 = vlaneseq
        %v450 = vshrl.u32 %v449, 7
        %v451 = vsub.s32 0, %v450
        %v452 = vrot.slane %v448, %v451
        %vm453 = vcmask 523264
        %v455 = vsel %vm453, %v409, 0
        %v458 = vsel %vm453, %v411, 0
        %v461 = vsel %vm453, %v413, 0
        %v464 = vsel %vm453, %v415, 0
        %v467 = vsel %vm453, %v417, 0
        %v470 = vsel %vm453, %v419, 0
        %v473 = vsel %vm453, %v421, 0
        %v476 = vsel %vm453, %v423, 0
        %v479 = vsel %vm453, %v425, 0
        %v482 = vsel %vm453, %v427, 0
        %v485 = vsel %vm453, %v429, 0
        %v488 = vsel %vm453, %v431, 0
        %v491 = vsel %vm453, %v433, 0
        %v494 = vsel %vm453, %v435, 0
        %v497 = vsel %vm453, %v437, 0
        %v500 = vsel %vm453, %v439, 0
        %502 = vmatprep.subr.mxu0 0.0
        %503 = vmatpush1.msra.mxu0 %v440
        %504 = vmatprep.subr.mxu0 0.0
        %505 = vmatpush1.msra.mxu0 %v441
        %506 = vmatprep.subr.mxu0 0.0
        %507 = vmatpush1.msra.mxu0 %v442
        %508 = vmatprep.subr.mxu0 0.0
        %509 = vmatpush1.msra.mxu0 %v443
        %510 = vmatprep.subr.mxu0 0.0
        %511 = vmatpush1.msra.mxu0 %v444
        %512 = vmatprep.subr.mxu0 0.0
        %513 = vmatpush1.msra.mxu0 %v445
        %514 = vmatprep.subr.mxu0 0.0
        %515 = vmatpush1.msra.mxu0 %v446
        %516 = vmatprep.subr.mxu0 0.0
        %517 = vmatpush1.msra.mxu0 %v447
        %518 = vmatprep.subr.mxu0 0.0
        %519 = vmatpush1.msra.mxu0 0.0
        %520 = vmatprep.subr.mxu0 0.0
        %521 = vmatpush1.msra.mxu0 0.0
        %522 = vmatprep.subr.mxu0 0.0
        %523 = vmatpush1.msra.mxu0 0.0
        %524 = vmatprep.subr.mxu0 0.0
        %525 = vmatpush1.msra.mxu0 0.0
        %526 = vmatprep.subr.mxu0 0.0
        %527 = vmatpush1.msra.mxu0 0.0
        %528 = vmatprep.subr.mxu0 0.0
        %529 = vmatpush1.msra.mxu0 0.0
        %530 = vmatprep.subr.mxu0 0.0
        %531 = vmatpush1.msra.mxu0 0.0
        %532 = vmatprep.subr.mxu0 0.0
        %533 = vmatpush1.msra.mxu0 0.0
        %534 = vmatprep.subr.mxu0 0.0
        %535 = vmatpush1.msra.mxu0 0.0
        %536 = vmatprep.subr.mxu0 0.0
        %537 = vmatpush1.msra.mxu0 0.0
        %538 = vmatprep.subr.mxu0 0.0
        %539 = vmatpush1.msra.mxu0 0.0
        %540 = vmatprep.subr.mxu0 0.0
        %541 = vmatpush1.msra.mxu0 0.0
        %542 = vmatprep.subr.mxu0 0.0
        %543 = vmatpush1.msra.mxu0 0.0
        %544 = vmatprep.subr.mxu0 0.0
        %545 = vmatpush1.msra.mxu0 0.0
        %546 = vmatprep.subr.mxu0 0.0
        %547 = vmatpush1.msra.mxu0 0.0
        %548 = vmatprep.subr.mxu0 0.0
        %549 = vmatpush1.msra.mxu0 0.0
        %550 = vmatprep.subr.mxu0 0.0
        %551 = vmatpush1.msra.mxu0 0.0
        %552 = vmatprep.subr.mxu0 0.0
        %553 = vmatpush1.msra.mxu0 0.0
        %554 = vmatprep.subr.mxu0 0.0
        %555 = vmatpush1.msra.mxu0 0.0
        %556 = vmatprep.subr.mxu0 0.0
        %557 = vmatpush1.msra.mxu0 0.0
        %558 = vmatprep.subr.mxu0 0.0
        %559 = vmatpush1.msra.mxu0 0.0
        %560 = vmatprep.subr.mxu0 0.0
        %561 = vmatpush1.msra.mxu0 0.0
        %562 = vmatprep.subr.mxu0 0.0
        %563 = vmatpush1.msra.mxu0 0.0
        %564 = vmatprep.subr.mxu0 0.0
        %565 = vmatpush1.msra.mxu0 0.0
        %566 = vmatprep.mubr.f32.mxu0 0.0
        %567 = vmatmul.mubr.f32.gmra.mrb[0].mxu0 %v455
        %v568 = vpop.f32.mrb[0].mxu0
        %v569 = vadd.f32 %v452, %v568
        %v570 = vpop.f32.mrb[0].mxu0
        %571 = vmatprep.mubr.f32.mxu0 0.0
        %572 = vmatmul.mubr.f32.gmra.mrb[0].mxu0 %v458
        %v573 = vpop.f32.mrb[0].mxu0
        %v574 = vadd.f32 %v452, %v573
        %v575 = vpop.f32.mrb[0].mxu0
        %576 = vmatprep.mubr.f32.mxu0 0.0
        %577 = vmatmul.mubr.f32.gmra.mrb[0].mxu0 %v461
        %v578 = vpop.f32.mrb[0].mxu0
        %v579 = vadd.f32 %v452, %v578
        %v580 = vpop.f32.mrb[0].mxu0
        %581 = vmatprep.mubr.f32.mxu0 0.0
        %582 = vmatmul.mubr.f32.gmra.mrb[0].mxu0 %v464
        %v583 = vpop.f32.mrb[0].mxu0
        %v584 = vadd.f32 %v452, %v583
        %v585 = vpop.f32.mrb[0].mxu0
        %586 = vmatprep.mubr.f32.mxu0 0.0
        %587 = vmatmul.mubr.f32.gmra.mrb[0].mxu0 %v467
        %v588 = vpop.f32.mrb[0].mxu0
        %v589 = vadd.f32 %v452, %v588
        %v590 = vpop.f32.mrb[0].mxu0
        %591 = vmatprep.mubr.f32.mxu0 0.0
        %592 = vmatmul.mubr.f32.gmra.mrb[0].mxu0 %v470
        %v593 = vpop.f32.mrb[0].mxu0
        %v594 = vadd.f32 %v452, %v593
        %v595 = vpop.f32.mrb[0].mxu0
        %596 = vmatprep.mubr.f32.mxu0 0.0
        %597 = vmatmul.mubr.f32.gmra.mrb[0].mxu0 %v473
        %v598 = vpop.f32.mrb[0].mxu0
        %v599 = vadd.f32 %v452, %v598
        %v600 = vpop.f32.mrb[0].mxu0
        %601 = vmatprep.mubr.f32.mxu0 0.0
        %602 = vmatmul.mubr.f32.gmra.mrb[0].mxu0 %v476
        %v603 = vpop.f32.mrb[0].mxu0
        %v604 = vadd.f32 %v452, %v603
        %v605 = vpop.f32.mrb[0].mxu0
        %606 = vmatprep.mubr.f32.mxu0 0.0
        %607 = vmatmul.mubr.f32.gmra.mrb[0].mxu0 %v479
        %v608 = vpop.f32.mrb[0].mxu0
        %v609 = vadd.f32 %v452, %v608
        %v610 = vpop.f32.mrb[0].mxu0
        %611 = vmatprep.mubr.f32.mxu0 0.0
        %612 = vmatmul.mubr.f32.gmra.mrb[0].mxu0 %v482
        %v613 = vpop.f32.mrb[0].mxu0
        %v614 = vadd.f32 %v452, %v613
        %v615 = vpop.f32.mrb[0].mxu0
        %616 = vmatprep.mubr.f32.mxu0 0.0
        %617 = vmatmul.mubr.f32.gmra.mrb[0].mxu0 %v485
        %v618 = vpop.f32.mrb[0].mxu0
        %v619 = vadd.f32 %v452, %v618
        %v620 = vpop.f32.mrb[0].mxu0
        %621 = vmatprep.mubr.f32.mxu0 0.0
        %622 = vmatmul.mubr.f32.gmra.mrb[0].mxu0 %v488
        %v623 = vpop.f32.mrb[0].mxu0
        %v624 = vadd.f32 %v452, %v623
        %v625 = vpop.f32.mrb[0].mxu0
        %626 = vmatprep.mubr.f32.mxu0 0.0
        %627 = vmatmul.mubr.f32.gmra.mrb[0].mxu0 %v491
        %v628 = vpop.f32.mrb[0].mxu0
        %v629 = vadd.f32 %v452, %v628
        %v630 = vpop.f32.mrb[0].mxu0
        %631 = vmatprep.mubr.f32.mxu0 0.0
        %632 = vmatmul.mubr.f32.gmra.mrb[0].mxu0 %v494
        %v633 = vpop.f32.mrb[0].mxu0
        %v634 = vadd.f32 %v452, %v633
        %v635 = vpop.f32.mrb[0].mxu0
        %636 = vmatprep.mubr.f32.mxu0 0.0
        %637 = vmatmul.mubr.f32.gmra.mrb[0].mxu0 %v497
        %v638 = vpop.f32.mrb[0].mxu0
        %v639 = vadd.f32 %v452, %v638
        %v640 = vpop.f32.mrb[0].mxu0
        %641 = vmatprep.mubr.f32.mxu0 0.0
        %642 = vmatmul.mubr.f32.gmra.mrb[0].mxu0 %v500
        %v643 = vpop.f32.mrb[0].mxu0
        %v644 = vadd.f32 %v452, %v643
        %v645 = vpop.f32.mrb[0].mxu0
        %646 = vdwg.mxu0
        %v647 = vtanh.pop %v569
        %v648 = vtanh.pop %v574
        %v649 = vtanh.pop %v579
        %v650 = vtanh.pop %v584
        %v651 = vtanh.pop %v589
        %v652 = vtanh.pop %v594
        %v653 = vtanh.pop %v599
        %v654 = vtanh.pop %v604
        %v655 = vtanh.pop %v609
        %v656 = vtanh.pop %v614
        %v657 = vtanh.pop %v619
        %v658 = vtanh.pop %v624
        %v659 = vtanh.pop %v629
        %v660 = vtanh.pop %v634
        %v661 = vtanh.pop %v639
        %v662 = vtanh.pop %v644
        %v663 = vld [vmem:[%s1 + $0x50] sm:$0x1]
        %v664 = vld [vmem:[%s1 + $0x58] sm:$0x1]
        %v665 = vlaneseq
        %v666 = vshrl.u32 %v665, 7
        %v667 = vsub.s32 0, %v666
        %v668 = vrot.slane %v663, %v667
        %v669 = vmul.f32 %v647, %v668
        %v670 = vmul.f32 %v648, %v668
        %v671 = vmul.f32 %v649, %v668
        %v672 = vmul.f32 %v650, %v668
        %v673 = vmul.f32 %v651, %v668
        %v674 = vmul.f32 %v652, %v668
        %v675 = vmul.f32 %v653, %v668
        %v676 = vmul.f32 %v654, %v668
        %v677 = vmul.f32 %v655, %v668
        %v678 = vmul.f32 %v656, %v668
        %v679 = vmul.f32 %v657, %v668
        %v680 = vmul.f32 %v658, %v668
        %v681 = vmul.f32 %v659, %v668
        %v682 = vmul.f32 %v660, %v668
        %v683 = vmul.f32 %v661, %v668
        %v684 = vmul.f32 %v662, %v668
        %v685 = vsel %vm453, %v669, 0.0
        %686 = vadd.xlane.f32.xlu0 %v685
        %v687 = vpop.xlane.xlu0 %686
        %v688 = vsel %vm453, %v670, 0.0
        %689 = vadd.xlane.f32.xlu0 %v688
        %v690 = vpop.xlane.xlu0 %689
        %v691 = vsel %vm453, %v671, 0.0
        %692 = vadd.xlane.f32.xlu0 %v691
        %v693 = vpop.xlane.xlu0 %692
        %v694 = vsel %vm453, %v672, 0.0
        %695 = vadd.xlane.f32.xlu0 %v694
        %v696 = vpop.xlane.xlu0 %695
        %v697 = vsel %vm453, %v673, 0.0
        %698 = vadd.xlane.f32.xlu0 %v697
        %v699 = vpop.xlane.xlu0 %698
        %v700 = vsel %vm453, %v674, 0.0
        %701 = vadd.xlane.f32.xlu0 %v700
        %v702 = vpop.xlane.xlu0 %701
        %v703 = vsel %vm453, %v675, 0.0
        %704 = vadd.xlane.f32.xlu0 %v703
        %v705 = vpop.xlane.xlu0 %704
        %v706 = vsel %vm453, %v676, 0.0
        %707 = vadd.xlane.f32.xlu0 %v706
        %v708 = vpop.xlane.xlu0 %707
        %v709 = vsel %vm453, %v677, 0.0
        %710 = vadd.xlane.f32.xlu0 %v709
        %v711 = vpop.xlane.xlu0 %710
        %v712 = vsel %vm453, %v678, 0.0
        %713 = vadd.xlane.f32.xlu0 %v712
        %v714 = vpop.xlane.xlu0 %713
        %v715 = vsel %vm453, %v679, 0.0
        %716 = vadd.xlane.f32.xlu0 %v715
        %v717 = vpop.xlane.xlu0 %716
        %v718 = vsel %vm453, %v680, 0.0
        %719 = vadd.xlane.f32.xlu0 %v718
        %v720 = vpop.xlane.xlu0 %719
        %v721 = vsel %vm453, %v681, 0.0
        %722 = vadd.xlane.f32.xlu0 %v721
        %v723 = vpop.xlane.xlu0 %722
        %v724 = vsel %vm453, %v682, 0.0
        %725 = vadd.xlane.f32.xlu0 %v724
        %v726 = vpop.xlane.xlu0 %725
        %v727 = vsel %vm453, %v683, 0.0
        %728 = vadd.xlane.f32.xlu0 %v727
        %v729 = vpop.xlane.xlu0 %728
        %v730 = vsel %vm453, %v684, 0.0
        %731 = vadd.xlane.f32.xlu0 %v730
        %v732 = vpop.xlane.xlu0 %731
        %734 = vset.pattern.permute.xlu0 0
        %735 = vperm.xlu0 %734, %v664
        %v736 = vpop.permute.xlu0 %735
        %v737 = vlaneseq
        %v738 = vshrl.u32 %v737, 7
        %v739 = vsub.s32 0, %v738
        %v740 = vrot.slane %v736, %v739
        %v742 = vadd.f32 %v687, %v740
        %v743 = vadd.f32 %v690, %v740
        %v744 = vadd.f32 %v693, %v740
        %v745 = vadd.f32 %v696, %v740
        %v746 = vadd.f32 %v699, %v740
        %v747 = vadd.f32 %v702, %v740
        %v748 = vadd.f32 %v705, %v740
        %v749 = vadd.f32 %v708, %v740
        %v750 = vadd.f32 %v711, %v740
        %v751 = vadd.f32 %v714, %v740
        %v752 = vadd.f32 %v717, %v740
        %v753 = vadd.f32 %v720, %v740
        %v754 = vadd.f32 %v723, %v740
        %v755 = vadd.f32 %v726, %v740
        %v756 = vadd.f32 %v729, %v740
        %v757 = vadd.f32 %v732, %v740
        %774 = vset.pattern.permute.xlu0 0
        %775 = vperm.xlu0 %774, %v742
        %v776 = vpop.permute.xlu0 %775
        %777 = vset.pattern.permute.xlu0 0
        %778 = vperm.xlu0 %777, %v743
        %v779 = vpop.permute.xlu0 %778
        %780 = vset.pattern.permute.xlu0 0
        %781 = vperm.xlu0 %780, %v744
        %v782 = vpop.permute.xlu0 %781
        %783 = vset.pattern.permute.xlu0 0
        %784 = vperm.xlu0 %783, %v745
        %v785 = vpop.permute.xlu0 %784
        %786 = vset.pattern.permute.xlu0 0
        %787 = vperm.xlu0 %786, %v746
        %v788 = vpop.permute.xlu0 %787
        %789 = vset.pattern.permute.xlu0 0
        %790 = vperm.xlu0 %789, %v747
        %v791 = vpop.permute.xlu0 %790
        %792 = vset.pattern.permute.xlu0 0
        %793 = vperm.xlu0 %792, %v748
        %v794 = vpop.permute.xlu0 %793
        %795 = vset.pattern.permute.xlu0 0
        %796 = vperm.xlu0 %795, %v749
        %v797 = vpop.permute.xlu0 %796
        %798 = vset.pattern.permute.xlu0 0
        %799 = vperm.xlu0 %798, %v750
        %v800 = vpop.permute.xlu0 %799
        %801 = vset.pattern.permute.xlu0 0
        %802 = vperm.xlu0 %801, %v751
        %v803 = vpop.permute.xlu0 %802
        %804 = vset.pattern.permute.xlu0 0
        %805 = vperm.xlu0 %804, %v752
        %v806 = vpop.permute.xlu0 %805
        %807 = vset.pattern.permute.xlu0 0
        %808 = vperm.xlu0 %807, %v753
        %v809 = vpop.permute.xlu0 %808
        %810 = vset.pattern.permute.xlu0 0
        %811 = vperm.xlu0 %810, %v754
        %v812 = vpop.permute.xlu0 %811
        %813 = vset.pattern.permute.xlu0 0
        %814 = vperm.xlu0 %813, %v755
        %v815 = vpop.permute.xlu0 %814
        %816 = vset.pattern.permute.xlu0 0
        %817 = vperm.xlu0 %816, %v756
        %v818 = vpop.permute.xlu0 %817
        %819 = vset.pattern.permute.xlu0 0
        %820 = vperm.xlu0 %819, %v757
        %v821 = vpop.permute.xlu0 %820
        %v822 = vlaneseq
        %v823 = vand.u32 %v822, 127
        %v824 = vlaneseq
        %v825 = vshrl.u32 %v824, 7
        %v826 = vsub.s32 %v823, %v825
        %v827 = vrot.slane %v776, %v826
        %v828 = vadd.s32 %v823, 4294967288
        %v829 = vlaneseq
        %v830 = vshrl.u32 %v829, 7
        %v831 = vsub.s32 %v828, %v830
        %v832 = vrot.slane %v779, %v831
        %vm833 = vcmask 130112
        %v834 = vsel %vm833, %v832, %v827
        %v835 = vadd.s32 %v823, 4294967280
        %v836 = vlaneseq
        %v837 = vshrl.u32 %v836, 7
        %v838 = vsub.s32 %v835, %v837
        %v839 = vrot.slane %v782, %v838
        %vm840 = vcmask 195712
        %v841 = vsel %vm840, %v839, %v834
        %v842 = vadd.s32 %v823, 4294967272
        %v843 = vlaneseq
        %v844 = vshrl.u32 %v843, 7
        %v845 = vsub.s32 %v842, %v844
        %v846 = vrot.slane %v785, %v845
        %vm847 = vcmask 261312
        %v848 = vsel %vm847, %v846, %v841
        %v849 = vadd.s32 %v823, 4294967264
        %v850 = vlaneseq
        %v851 = vshrl.u32 %v850, 7
        %v852 = vsub.s32 %v849, %v851
        %v853 = vrot.slane %v788, %v852
        %vm854 = vcmask 326912
        %v855 = vsel %vm854, %v853, %v848
        %v856 = vadd.s32 %v823, 4294967256
        %v857 = vlaneseq
        %v858 = vshrl.u32 %v857, 7
        %v859 = vsub.s32 %v856, %v858
        %v860 = vrot.slane %v791, %v859
        %vm861 = vcmask 392512
        %v862 = vsel %vm861, %v860, %v855
        %v863 = vadd.s32 %v823, 4294967248
        %v864 = vlaneseq
        %v865 = vshrl.u32 %v864, 7
        %v866 = vsub.s32 %v863, %v865
        %v867 = vrot.slane %v794, %v866
        %vm868 = vcmask 458112
        %v869 = vsel %vm868, %v867, %v862
        %v870 = vadd.s32 %v823, 4294967240
        %v871 = vlaneseq
        %v872 = vshrl.u32 %v871, 7
        %v873 = vsub.s32 %v870, %v872
        %v874 = vrot.slane %v797, %v873
        %vm875 = vcmask 523712
        %v876 = vsel %vm875, %v874, %v869
        %v877 = vadd.s32 %v823, 4294967232
        %v878 = vlaneseq
        %v879 = vshrl.u32 %v878, 7
        %v880 = vsub.s32 %v877, %v879
        %v881 = vrot.slane %v800, %v880
        %vm882 = vcmask 589312
        %v883 = vsel %vm882, %v881, %v876
        %v884 = vadd.s32 %v823, 4294967224
        %v885 = vlaneseq
        %v886 = vshrl.u32 %v885, 7
        %v887 = vsub.s32 %v884, %v886
        %v888 = vrot.slane %v803, %v887
        %vm889 = vcmask 654912
        %v890 = vsel %vm889, %v888, %v883
        %v891 = vadd.s32 %v823, 4294967216
        %v892 = vlaneseq
        %v893 = vshrl.u32 %v892, 7
        %v894 = vsub.s32 %v891, %v893
        %v895 = vrot.slane %v806, %v894
        %vm896 = vcmask 720512
        %v897 = vsel %vm896, %v895, %v890
        %v898 = vadd.s32 %v823, 4294967208
        %v899 = vlaneseq
        %v900 = vshrl.u32 %v899, 7
        %v901 = vsub.s32 %v898, %v900
        %v902 = vrot.slane %v809, %v901
        %vm903 = vcmask 786112
        %v904 = vsel %vm903, %v902, %v897
        %v905 = vadd.s32 %v823, 4294967200
        %v906 = vlaneseq
        %v907 = vshrl.u32 %v906, 7
        %v908 = vsub.s32 %v905, %v907
        %v909 = vrot.slane %v812, %v908
        %vm910 = vcmask 851712
        %v911 = vsel %vm910, %v909, %v904
        %v912 = vadd.s32 %v823, 4294967192
        %v913 = vlaneseq
        %v914 = vshrl.u32 %v913, 7
        %v915 = vsub.s32 %v912, %v914
        %v916 = vrot.slane %v815, %v915
        %vm917 = vcmask 917312
        %v918 = vsel %vm917, %v916, %v911
        %v919 = vadd.s32 %v823, 4294967184
        %v920 = vlaneseq
        %v921 = vshrl.u32 %v920, 7
        %v922 = vsub.s32 %v919, %v921
        %v923 = vrot.slane %v818, %v922
        %vm924 = vcmask 982912
        %v925 = vsel %vm924, %v923, %v918
        %v926 = vadd.s32 %v823, 4294967176
        %v927 = vlaneseq
        %v928 = vshrl.u32 %v927, 7
        %v929 = vsub.s32 %v926, %v928
        %v930 = vrot.slane %v821, %v929
        %vm931 = vcmask 1048512
        %v932 = vsel %vm931, %v930, %v925
        %934 = vst [vmem:[%s136] sm:$0x1] %v932
        %s935 = sand.u32 %s71, 1
        %s936 = scalar_lea.sflag [#allocation3], %s935
        %s937 = sand.u32 %s71, 1
        %s938 = scalar_lea.vmem [#allocation2], %s937
        // Predicated region
        $region29: #{tpu_custom_call.1} parent=27 // pred_check
          %p939 = pneg %p81
        $region30: #{tpu_custom_call.1} parent=27 // pred_check_branch
          %941 = sbr.rel (%p939) target = $region32
        $region31: #{tpu_custom_call.1} parent=27 // pred_region
          %s943 = ssub.s32 16, 16
          %944 = vsyncadd %s936, %s943
          %s945 = smul.addr %s16, 16
          %s946 = scalar_lea.hbm %s2, %s945
          %s948 = sshll.u32 %s938, 4
          %s949 = int_to_ptr.vmem [resolvable:$true] %s948
          %951 = dma.vmem_to_hbm [thread:$0]  %s949, 16, %s946, %s936
        $region32: #{tpu_custom_call.1} parent=27 // pred_fallthru
          _
      $region28: #{tpu_custom_call.1} parent=5 // pred_fallthru
        _
      %p952 = scmp.le.s32.totalorder 2, %s11
      // Predicated region
      $region33: #{tpu_custom_call.1} parent=5 // pred_check
        %p953 = pneg %p952
      $region34: #{tpu_custom_call.1} parent=5 // pred_check_branch
        %955 = sbr.rel (%p953) target = $region36
      $region35: #{tpu_custom_call.1} parent=5 // pred_region
        %s956 = ssub.s32 %s11, 2
        // Predicated region
        $region37: #{tpu_custom_call.1} parent=35 // pred_check
          %p957 = pneg %p87
        $region38: #{tpu_custom_call.1} parent=35 // pred_check_branch
          %959 = sbr.rel (%p957) target = $region40
        $region39: #{tpu_custom_call.1} parent=35 // pred_region
          %s960 = sand.u32 %s72, 1
          %s961 = scalar_lea.sflag [#allocation3], %s960
          %s962 = sand.u32 %s72, 1
          %s963 = scalar_lea.vmem [#allocation2], %s962
          %964 = dma.done %s961, 16
        $region40: #{tpu_custom_call.1} parent=35 // pred_fallthru
          _
      $region36: #{tpu_custom_call.1} parent=5 // pred_fallthru
        _
    $region6: #{tpu_custom_call.1} parent=1 // loop_footer
      %s15 = sadd.s32 1, %s11
    $region7: #{tpu_custom_call.1} parent=1 // loop_footer_branch
      %10 = sbr.rel target = $region3
    $region8: #{tpu_custom_call.1} parent=1 // loop_exit
      _
    %965 = vsyncpa [#allocation3], 1
    %s966 = scalar_lea.sflag [#allocation3], 1
    %967 = vsyncpa %s966, 1

</llo_original>
